<compile_context>
chip_gen: v7x
topology: tpu7x:2x2x1
jax: 0.10.0
libtpu: 0.0.40
codegen_flags: <defaults>
</compile_context>

<pallas_src>
import functools
import math

import numpy as np
import jax
import jax.numpy as jnp
from jax.experimental import pallas as pl
from jax.experimental.pallas import tpu as pltpu

EPS = 1e-5                      # nn.GroupNorm default
_INV_SQRT2 = 1.0 / math.sqrt(2.0)
_LANE = 128
_SUBLANE = 8


def _gelu(y, approximate):
    if approximate:
        # tanh approximation: routes the transcendental to the (otherwise idle) EUP.
        c = math.sqrt(2.0 / math.pi)
        return 0.5 * y * (1.0 + jnp.tanh(c * (y + 0.044715 * (y * y * y))))
    # Exact GELU (PyTorch default): 0.5 * y * (1 + erf(y / sqrt(2)))
    return 0.5 * y * (1.0 + jax.lax.erf(y * _INV_SQRT2))


def _membership(bt, C, G):
    """0/1 group-membership matrices, built once on host (constant-folded)."""
    cg = C // G
    rows = np.arange(bt * C)
    gid = (rows // C) * G + (rows % C) // cg
    M = (np.arange(bt * G)[:, None] == gid[None, :]).astype(np.float32)   # (ngt, R)
    return M, np.ascontiguousarray(M.T)                                   # (R, ngt)


# ---------------------------------------------------------------------------
# Fused single-pass kernel (one block = `bt` whole samples)
# ---------------------------------------------------------------------------
def _gn_gelu_fused_kernel(x_ref, m_ref, mt_ref, gamma_ref, beta_ref, o_ref, *,
                          inv_n, approximate):
    x = x_ref[...].astype(jnp.float32)                                  # (R, HW)

    # Lane-axis reductions (XLU slot, ~free vs VALU).
    stats = jnp.concatenate(
        [jnp.sum(x, axis=-1, keepdims=True),
         jnp.sum(x * x, axis=-1, keepdims=True)], axis=-1)              # (R, 2)

    # One (ngt,R)@(R,2) matmul reduces both sums per group (MXU otherwise idle).
    g = jnp.dot(m_ref[...], stats, preferred_element_type=jnp.float32) * inv_n
    g_mean = g[:, 0:1]
    # TODO(synk): shifted/Welford variance if inputs can have |mean| >> std.
    g_var = jnp.maximum(g[:, 1:2] - g_mean * g_mean, 0.0)               # biased (torch)

    # One (R,ngt)@(ngt,2) matmul broadcasts [mean|var] back to rows.
    mv = jnp.dot(mt_ref[...], jnp.concatenate([g_mean, g_var], axis=-1),
                 preferred_element_type=jnp.float32)                     # (R, 2)

    # Fold normalization + affine into one per-row scale/shift.
    a = gamma_ref[...] * jax.lax.rsqrt(mv[:, 1:2] + EPS)                 # (R, 1)
    b = beta_ref[...] - mv[:, 0:1] * a                                   # (R, 1)

    o_ref[...] = _gelu(x * a + b, approximate).astype(o_ref.dtype)


# ---------------------------------------------------------------------------
# HW-tiled fallback (two passes) for very large C*HW
# ---------------------------------------------------------------------------
def _gn_stats_kernel(x_ref, m_ref, mt_ref, gamma_ref, beta_ref, a_ref, b_ref,
                     acc_ref, *, hw_true, thw, inv_n):
    h = pl.program_id(1)
    x = x_ref[...].astype(jnp.float32)                                   # (C, thw)
    if hw_true % thw != 0:                 # static: only pay the mask when ragged
        col = jax.lax.broadcasted_iota(jnp.int32, x.shape, 1) + h * thw
        x = jnp.where(col < hw_true, x, 0.0)

    stats = jnp.concatenate(
        [jnp.sum(x, axis=-1, keepdims=True),
         jnp.sum(x * x, axis=-1, keepdims=True)], axis=-1)               # (C, 2)

    @pl.when(h == 0)
    def _():
        acc_ref[...] = stats

    @pl.when(h > 0)
    def _():
        acc_ref[...] = acc_ref[...] + stats

    # Fold the group reduction + per-row scale/shift into the last spatial step.
    @pl.when(h == pl.num_programs(1) - 1)
    def _():
        g = jnp.dot(m_ref[...], acc_ref[...],
                    preferred_element_type=jnp.float32) * inv_n          # (G, 2)
        g_mean = g[:, 0:1]
        g_var = jnp.maximum(g[:, 1:2] - g_mean * g_mean, 0.0)
        mv = jnp.dot(mt_ref[...], jnp.concatenate([g_mean, g_var], axis=-1),
                     preferred_element_type=jnp.float32)                 # (C, 2)
        a = gamma_ref[...] * jax.lax.rsqrt(mv[:, 1:2] + EPS)
        a_ref[...] = a
        b_ref[...] = beta_ref[...] - mv[:, 0:1] * a


def _gn_apply_kernel(x_ref, a_ref, b_ref, o_ref, *, approximate):
    y = x_ref[...].astype(jnp.float32) * a_ref[...] + b_ref[...]
    o_ref[...] = _gelu(y, approximate).astype(o_ref.dtype)


# ---------------------------------------------------------------------------
# Sizing helpers
# ---------------------------------------------------------------------------
def _vmem_limits():
    cap = None
    try:
        cap = int(getattr(pltpu.get_tpu_info(), "vmem_capacity_bytes", 0)) or None
    except Exception:
        cap = None
    if cap is None:
        cap = 64 << 20
    # v7x has 64 MiB/TC and get_tpu_info may report per-chip capacity: never ask
    # for more than 48 MiB of scoped VMEM on any generation.
    vmem_limit = min(max(int(cap * 3 // 4), 16 << 20), 48 << 20)
    block_budget = int(vmem_limit * 3 // 4)
    return vmem_limit, block_budget


def _choose_batch_tile(B, C, G, HW, itemsize, block_budget):
    def block_bytes(bt):
        R, ngt = bt * C, bt * G
        x_io = R * HW * (2 * itemsize + 2 * itemsize)     # in + out, double-buffered
        extra = R * HW * 4 if itemsize < 4 else 0         # f32 upcast of sub-f32 input
        mm = 2 * ngt * R * 4 * 2                          # M and MT blocks
        vec = 2 * R * 4 * 2                               # gamma / beta columns
        return x_io + extra + mm + vec

    candidates = [bt for bt in range(1, B + 1)
                  if B % bt == 0 and ((bt * C) % _SUBLANE == 0 or bt == B)]
    feasible = [bt for bt in candidates if block_bytes(bt) <= block_budget]
    if not feasible:
        return None                     # one sample doesn't fit -> HW-tiled fallback

    # Prefer many grid steps (software pipelining; both v7x TCs) over giant blocks;
    # the HBM roofline plateaus well below 16 MiB blocks.
    min_steps = min(B, 8)
    max_block = 16 << 20
    steps_ok = [bt for bt in feasible if B // bt >= min_steps]
    pool = steps_ok if steps_ok else feasible
    capped = [bt for bt in pool if block_bytes(bt) <= max_block]
    return max(capped) if capped else min(pool)


def _choose_hw_tile(C, HW, itemsize, block_budget):
    per_col = C * _LANE * (4 * itemsize + (4 if itemsize < 4 else 0))
    max_cols = max(1, block_budget // max(per_col, 1))
    hw_cols = (HW + _LANE - 1) // _LANE
    cols = max(1, min(max_cols, hw_cols, 2048 // _LANE))   # target 512-2048 lanes
    return cols * _LANE


# ---------------------------------------------------------------------------
# Wrapper
# ---------------------------------------------------------------------------
def groupnorm_gelu(x, gamma, beta, num_groups, *, approximate=False,
                   force_tiled=False, tile_hw=None):
    """x: (B, C, H, W) NCHW; gamma, beta: (C,). Returns same shape/dtype as x."""
    B, C, H, W = x.shape
    assert C % num_groups == 0
    HW = H * W

    vmem_limit, block_budget = _vmem_limits()
    itemsize = jnp.dtype(x.dtype).itemsize

    x2 = x.reshape(B * C, HW)          # free (contiguous); no lane padding / slicing
    bt = None if force_tiled else _choose_batch_tile(
        B, C, num_groups, HW, itemsize, block_budget)

    if bt is not None:
        out2 = _fused_path(x2, gamma, beta, num_groups, B, C, HW, bt,
                           vmem_limit, approximate)
    else:
        out2 = _tiled_path(x2, gamma, beta, num_groups, B, C, HW,
                           block_budget, vmem_limit, itemsize, approximate,
                           tile_hw=tile_hw)
    return out2.reshape(B, C, H, W)


def _fused_path(x2, gamma, beta, num_groups, B, C, HW, bt, vmem_limit, approximate):
    R = bt * C
    ngt = bt * num_groups
    cg = C // num_groups

    M, MT = _membership(bt, C, num_groups)                 # host-side constants
    gamma_r = jnp.tile(gamma.reshape(C, 1).astype(jnp.float32), (bt, 1))
    beta_r = jnp.tile(beta.reshape(C, 1).astype(jnp.float32), (bt, 1))

    kernel = functools.partial(_gn_gelu_fused_kernel,
                               inv_n=1.0 / float(cg * HW),
                               approximate=approximate)

    return pl.pallas_call(
        kernel,
        out_shape=jax.ShapeDtypeStruct((B * C, HW), x2.dtype),
        grid_spec=pltpu.PrefetchScalarGridSpec(
            num_scalar_prefetch=0,
            grid=(B // bt,),
            in_specs=[
                pl.BlockSpec((R, HW), lambda i: (i, 0)),     # last dim = full HW
                pl.BlockSpec((ngt, R), lambda i: (0, 0)),    # M  (constant block)
                pl.BlockSpec((R, ngt), lambda i: (0, 0)),    # MT (constant block)
                pl.BlockSpec((R, 1), lambda i: (0, 0)),      # gamma
                pl.BlockSpec((R, 1), lambda i: (0, 0)),      # beta
            ],
            out_specs=pl.BlockSpec((R, HW), lambda i: (i, 0)),
        ),
        compiler_params=pltpu.CompilerParams(
            dimension_semantics=("parallel",),
            vmem_limit_bytes=vmem_limit,
        ),
    )(x2, jnp.asarray(M), jnp.asarray(MT), gamma_r, beta_r)


def _tiled_path(x2, gamma, beta, num_groups, B, C, HW,
                block_budget, vmem_limit, itemsize, approximate, tile_hw=None):
    # TODO(synk): pad the channel axis to a multiple of 8 to lift this restriction.
    assert C % _SUBLANE == 0 or B == 1, "HW-tiled fallback needs num_channels % 8 == 0"
    cg = C // num_groups
    thw = tile_hw if tile_hw is not None else _choose_hw_tile(C, HW, itemsize,
                                                              block_budget)
    n_h = pl.cdiv(HW, thw)

    Mc, MTc = _membership(1, C, num_groups)
    gamma_c = gamma.reshape(C, 1).astype(jnp.float32)
    beta_c = beta.reshape(C, 1).astype(jnp.float32)

    # Pass 1: per-channel sums accumulated over spatial tiles; group reduce + a/b
    # emitted in the last spatial step (no host-side reduction between passes).
    stats_kernel = functools.partial(_gn_stats_kernel, hw_true=HW, thw=thw,
                                     inv_n=1.0 / float(cg * HW))
    a, b = pl.pallas_call(
        stats_kernel,
        out_shape=(jax.ShapeDtypeStruct((B * C, 1), jnp.float32),
                   jax.ShapeDtypeStruct((B * C, 1), jnp.float32)),
        grid_spec=pltpu.PrefetchScalarGridSpec(
            num_scalar_prefetch=0,
            grid=(B, n_h),
            in_specs=[
                pl.BlockSpec((C, thw), lambda bi, h: (bi, h)),
                pl.BlockSpec((num_groups, C), lambda bi, h: (0, 0)),
                pl.BlockSpec((C, num_groups), lambda bi, h: (0, 0)),
                pl.BlockSpec((C, 1), lambda bi, h: (0, 0)),
                pl.BlockSpec((C, 1), lambda bi, h: (0, 0)),
            ],
            out_specs=(pl.BlockSpec((C, 1), lambda bi, h: (bi, 0)),
                       pl.BlockSpec((C, 1), lambda bi, h: (bi, 0))),
            scratch_shapes=[pltpu.VMEM((C, 2), jnp.float32)],
        ),
        compiler_params=pltpu.CompilerParams(
            dimension_semantics=("parallel", "arbitrary"),
            vmem_limit_bytes=vmem_limit,
        ),
    )(x2, jnp.asarray(Mc), jnp.asarray(MTc), gamma_c, beta_c)

    # Pass 2: streamed apply of y = x*a + b and GELU.
    apply_kernel = functools.partial(_gn_apply_kernel, approximate=approximate)
    return pl.pallas_call(
        apply_kernel,
        out_shape=jax.ShapeDtypeStruct((B * C, HW), x2.dtype),
        grid_spec=pltpu.PrefetchScalarGridSpec(
            num_scalar_prefetch=0,
            grid=(B, n_h),
            in_specs=[pl.BlockSpec((C, thw), lambda bi, h: (bi, h)),
                      pl.BlockSpec((C, 1), lambda bi, h: (bi, 0)),
                      pl.BlockSpec((C, 1), lambda bi, h: (bi, 0))],
            out_specs=pl.BlockSpec((C, thw), lambda bi, h: (bi, h)),
        ),
        compiler_params=pltpu.CompilerParams(
            dimension_semantics=("parallel", "parallel"),
            vmem_limit_bytes=vmem_limit,
        ),
    )(x2, a, b)


# ---------------------------------------------------------------------------
# Reference + self-test
# ---------------------------------------------------------------------------
def _reference(x, gamma, beta, num_groups):
    B, C, H, W = x.shape
    xg = x.astype(jnp.float32).reshape(B, num_groups, (C // num_groups) * H * W)
    mean = xg.mean(axis=-1, keepdims=True)
    var = ((xg - mean) ** 2).mean(axis=-1, keepdims=True)
    xn = ((xg - mean) / jnp.sqrt(var + EPS)).reshape(B, C, H, W)
    y = xn * gamma.reshape(1, C, 1, 1) + beta.reshape(1, C, 1, 1)
    return 0.5 * y * (1.0 + jax.lax.erf(y * _INV_SQRT2))


if __name__ == "__main__":
    key = jax.random.PRNGKey(0)
    kx, kg, kb = jax.random.split(key, 3)

    C, G = 16, 8
    gamma = 1.0 + 0.1 * jax.random.normal(kg, (C,), dtype=jnp.float32)
    beta = 0.1 * jax.random.normal(kb, (C,), dtype=jnp.float32)

    # 1) fused path, lane-aligned spatial size.
    x = jax.random.normal(kx, (2, C, 16, 16), dtype=jnp.float32)
    out = jax.block_until_ready(groupnorm_gelu(x, gamma, beta, G))
    ref = _reference(x, gamma, beta, G)
    assert out.shape == x.shape and out.dtype == x.dtype
    assert jnp.allclose(out, ref, atol=1e-5, rtol=1e-5), "mismatch vs reference"

    # 2) fused path, H*W not a multiple of 128 (no HBM-level padding; masked stores).
    x2 = jax.random.normal(kx, (2, C, 7, 7), dtype=jnp.float32)
    out2 = jax.block_until_ready(groupnorm_gelu(x2, gamma, beta, G))
    assert jnp.allclose(out2, _reference(x2, gamma, beta, G),
                        atol=1e-5, rtol=1e-5), "mismatch vs reference (non-128 HW)"

    # 3) HW-tiled fallback (forced), stats accumulated across spatial tiles.
    x3 = jax.random.normal(kx, (2, C, 16, 32), dtype=jnp.float32)
    out3 = jax.block_until_ready(
        groupnorm_gelu(x3, gamma, beta, G, force_tiled=True, tile_hw=128))
    assert jnp.allclose(out3, _reference(x3, gamma, beta, G),
                        atol=1e-5, rtol=1e-5), "mismatch vs reference (tiled path)"

    print("KERNEL_OK")
</pallas_src>

<mosaic_0001>
module attributes {stable_mosaic.version = 11 : i64} {
  func.func @_gn_gelu_fused_kernel(%arg0: i32, %arg1: memref<16x256xf32, #tpu.memory_space<vmem>>, %arg2: memref<8x16xf32, #tpu.memory_space<vmem>>, %arg3: memref<16x8xf32, #tpu.memory_space<vmem>>, %arg4: memref<16x1xf32, #tpu.memory_space<vmem>>, %arg5: memref<16x1xf32, #tpu.memory_space<vmem>>, %arg6: memref<16x256xf32, #tpu.memory_space<vmem>>) attributes {dimension_semantics = [#tpu.dimension_semantics<parallel>], iteration_bounds = array<i64: 2>, scalar_prefetch = 0 : i64, scratch_operands = 0 : i64, tpu.core_type = #tpu.core_type<tc>, window_params = [{transform_indices = @transform_0, window_bounds = array<i64: 16, 256>}, {pipeline_mode = #tpu.pipeline_mode<synchronous>, transform_indices = @transform_1, window_bounds = array<i64: 8, 16>}, {pipeline_mode = #tpu.pipeline_mode<synchronous>, transform_indices = @transform_2, window_bounds = array<i64: 16, 8>}, {pipeline_mode = #tpu.pipeline_mode<synchronous>, transform_indices = @transform_3, window_bounds = array<i64: 16, 1>}, {pipeline_mode = #tpu.pipeline_mode<synchronous>, transform_indices = @transform_4, window_bounds = array<i64: 16, 1>}, {transform_indices = @transform_5, window_bounds = array<i64: 16, 256>}]} {
    %c0 = arith.constant 0 : index
    %c0_0 = arith.constant 0 : index
    %0 = vector.load %arg1[%c0, %c0_0] : memref<16x256xf32, #tpu.memory_space<vmem>>, vector<16x256xf32>
    %cst = arith.constant dense<0.000000e+00> : vector<16xf32>
    %1 = vector.multi_reduction <add>, %0, %cst [1] : vector<16x256xf32> to vector<16xf32>
    %2 = vector.shape_cast %1 : vector<16xf32> to vector<16x1xf32>
    %3 = arith.mulf %0, %0 : vector<16x256xf32>
    %cst_1 = arith.constant dense<0.000000e+00> : vector<16xf32>
    %4 = vector.multi_reduction <add>, %3, %cst_1 [1] : vector<16x256xf32> to vector<16xf32>
    %5 = vector.shape_cast %4 : vector<16xf32> to vector<16x1xf32>
    %6 = tpu.concatenate %2, %5 in 1 : vector<16x1xf32>, vector<16x1xf32> -> vector<16x2xf32>
    %c0_2 = arith.constant 0 : index
    %c0_3 = arith.constant 0 : index
    %7 = vector.load %arg2[%c0_2, %c0_3] : memref<8x16xf32, #tpu.memory_space<vmem>>, vector<8x16xf32>
    %cst_4 = arith.constant dense<0.000000e+00> : vector<8x2xf32>
    %8 = tpu.matmul %7, %6, %cst_4 {dimension_numbers = #tpu.dot_dimension_numbers<[1], [0], [0], [1], [0, 0, 1, 1], [], []>} : vector<8x16xf32>, vector<16x2xf32>, vector<8x2xf32> -> vector<8x2xf32>
    %cst_5 = arith.constant 0.001953125 : f32
    %9 = vector.broadcast %cst_5 : f32 to vector<8x2xf32>
    %10 = arith.mulf %8, %9 : vector<8x2xf32>
    %11 = vector.extract_strided_slice %10 {offsets = [0, 0], sizes = [8, 1], strides = [1, 1]} : vector<8x2xf32> to vector<8x1xf32>
    %12 = vector.extract_strided_slice %10 {offsets = [0, 1], sizes = [8, 1], strides = [1, 1]} : vector<8x2xf32> to vector<8x1xf32>
    %13 = arith.mulf %11, %11 : vector<8x1xf32>
    %14 = arith.subf %12, %13 : vector<8x1xf32>
    %cst_6 = arith.constant 0.000000e+00 : f32
    %15 = vector.broadcast %cst_6 : f32 to vector<8x1xf32>
    %16 = arith.maximumf %14, %15 : vector<8x1xf32>
    %c0_7 = arith.constant 0 : index
    %c0_8 = arith.constant 0 : index
    %17 = vector.load %arg3[%c0_7, %c0_8] : memref<16x8xf32, #tpu.memory_space<vmem>>, vector<16x8xf32>
    %18 = tpu.concatenate %11, %16 in 1 : vector<8x1xf32>, vector<8x1xf32> -> vector<8x2xf32>
    %cst_9 = arith.constant dense<0.000000e+00> : vector<16x2xf32>
    %19 = tpu.matmul %17, %18, %cst_9 {dimension_numbers = #tpu.dot_dimension_numbers<[1], [0], [0], [1], [0, 0, 1, 1], [], []>} : vector<16x8xf32>, vector<8x2xf32>, vector<16x2xf32> -> vector<16x2xf32>
    %c0_10 = arith.constant 0 : index
    %c0_11 = arith.constant 0 : index
    %20 = vector.load %arg4[%c0_10, %c0_11] : memref<16x1xf32, #tpu.memory_space<vmem>>, vector<16x1xf32>
    %21 = vector.extract_strided_slice %19 {offsets = [0, 1], sizes = [16, 1], strides = [1, 1]} : vector<16x2xf32> to vector<16x1xf32>
    %cst_12 = arith.constant 9.99999974E-6 : f32
    %22 = vector.broadcast %cst_12 : f32 to vector<16x1xf32>
    %23 = arith.addf %21, %22 : vector<16x1xf32>
    %24 = math.rsqrt %23 : vector<16x1xf32>
    %25 = arith.mulf %20, %24 : vector<16x1xf32>
    %c0_13 = arith.constant 0 : index
    %c0_14 = arith.constant 0 : index
    %26 = vector.load %arg5[%c0_13, %c0_14] : memref<16x1xf32, #tpu.memory_space<vmem>>, vector<16x1xf32>
    %27 = vector.extract_strided_slice %19 {offsets = [0, 0], sizes = [16, 1], strides = [1, 1]} : vector<16x2xf32> to vector<16x1xf32>
    %28 = arith.mulf %27, %25 : vector<16x1xf32>
    %29 = arith.subf %26, %28 : vector<16x1xf32>
    %30 = vector.broadcast %25 : vector<16x1xf32> to vector<16x256xf32>
    %31 = arith.mulf %0, %30 : vector<16x256xf32>
    %32 = vector.broadcast %29 : vector<16x1xf32> to vector<16x256xf32>
    %33 = arith.addf %31, %32 : vector<16x256xf32>
    %cst_15 = arith.constant 5.000000e-01 : f32
    %34 = vector.broadcast %cst_15 : f32 to vector<16x256xf32>
    %35 = arith.mulf %34, %33 : vector<16x256xf32>
    %cst_16 = arith.constant 0.707106769 : f32
    %36 = vector.broadcast %cst_16 : f32 to vector<16x256xf32>
    %37 = arith.mulf %33, %36 : vector<16x256xf32>
    %38 = math.erf %37 : vector<16x256xf32>
    %cst_17 = arith.constant 1.000000e+00 : f32
    %39 = vector.broadcast %cst_17 : f32 to vector<16x256xf32>
    %40 = arith.addf %39, %38 : vector<16x256xf32>
    %41 = arith.mulf %35, %40 : vector<16x256xf32>
    %c0_18 = arith.constant 0 : index
    %c0_19 = arith.constant 0 : index
    %42 = vector.load %arg6[%c0_18, %c0_19] : memref<16x256xf32, #tpu.memory_space<vmem>>, vector<16x256xf32>
    tpu.vector_store %arg6[%c0_18, %c0_19], %41 {strides = array<i32>} : memref<16x256xf32, #tpu.memory_space<vmem>>, vector<16x256xf32>,
    return
  }
  func.func @transform_0(%arg0: i32) -> (i32, i32) {
    %c0_i32 = arith.constant 0 : i32
    %c0_i32_0 = arith.constant 0 : i32
    return %arg0, %c0_i32 : i32, i32
  }
  func.func @transform_1(%arg0: i32) -> (i32, i32) {
    %c0_i32 = arith.constant 0 : i32
    %c0_i32_0 = arith.constant 0 : i32
    %c0_i32_1 = arith.constant 0 : i32
    return %c0_i32, %c0_i32_0 : i32, i32
  }
  func.func @transform_2(%arg0: i32) -> (i32, i32) {
    %c0_i32 = arith.constant 0 : i32
    %c0_i32_0 = arith.constant 0 : i32
    %c0_i32_1 = arith.constant 0 : i32
    return %c0_i32, %c0_i32_0 : i32, i32
  }
  func.func @transform_3(%arg0: i32) -> (i32, i32) {
    %c0_i32 = arith.constant 0 : i32
    %c0_i32_0 = arith.constant 0 : i32
    %c0_i32_1 = arith.constant 0 : i32
    return %c0_i32, %c0_i32_0 : i32, i32
  }
  func.func @transform_4(%arg0: i32) -> (i32, i32) {
    %c0_i32 = arith.constant 0 : i32
    %c0_i32_0 = arith.constant 0 : i32
    %c0_i32_1 = arith.constant 0 : i32
    return %c0_i32, %c0_i32_0 : i32, i32
  }
  func.func @transform_5(%arg0: i32) -> (i32, i32) {
    %c0_i32 = arith.constant 0 : i32
    %c0_i32_0 = arith.constant 0 : i32
    return %arg0, %c0_i32 : i32, i32
  }
}

</mosaic_0001>

<llo_original>
// kernel: tpu_custom_call.1
$region0: #{tpu_custom_call.1}
  #allocation0 [shape = 'u32[]', space=smem, size = 0x4, offset = 0x4, fixed_abs, tag = 'smem constant byte address 0x4 - core index']
  #allocation1 [shape = 'u32[144,128]{1,0:T(1,128)}', space=vmem, size = 0x12000, scoped, tag = 'internal scratch']
  %s0 = inlined_call_operand.hbm [shape: f32[32,256], index: 0, kind: input, shape index: {}]
  %s1 = inlined_call_operand.vmem [shape: f32[8,16], index: 1, kind: input, shape index: {}]
  %s2 = inlined_call_operand.vmem [shape: f32[16,8], index: 2, kind: input, shape index: {}]
  %s3 = inlined_call_operand.vmem [shape: f32[16,1], index: 3, kind: input, shape index: {}]
  %s4 = inlined_call_operand.vmem [shape: f32[16,1], index: 4, kind: input, shape index: {}]
  %s5 = inlined_call_operand.hbm [shape: f32[32,256], index: 5, kind: output, shape index: {}]
  %s6 = sld [smem:[#allocation0]]
  $region57: #{tpu_custom_call.1} parent=0
    _
  %s8 = ssub.s32 1, %s6
  %s9 = scalar_select 0, %s8, %s6
  $region1: #{tpu_custom_call.1} parent=0
    #allocation2 [shape = 'u8[32768]{0}', space=vmem, size = 0x8000, scoped, tag = 'input window, operand 0']
    #allocation3 [shape = 's32[2]{0}', space=sflag, size = 0x8, scoped, tag = 'scoped memory for tpu_custom_call.1']
    #allocation4 [shape = 's32[2]{0}', space=sflag, size = 0x8, scoped, tag = 'scoped memory for tpu_custom_call.1']
    #allocation5 [shape = 'u8[32768]{0}', space=vmem, size = 0x8000, scoped, tag = 'output window, operand 0']
    %10 = vsyncpa [#allocation3], 0
    %s11 = scalar_lea.sflag [#allocation3], 1
    %12 = vsyncpa %s11, 0
    %13 = vsyncpa [#allocation4], 0
    %s14 = scalar_lea.sflag [#allocation4], 1
    %15 = vsyncpa %s14, 0
    loop: start=0, step=1, limit=4
    $region2: #{tpu_custom_call.1} parent=1 // loop_pre_header
      _
    $region3: #{tpu_custom_call.1} parent=1 // loop_header
      %s17 = sphi 0, %s21
      %p18 = scmp.ge.s32.totalorder %s17, 4
      %s27 = sphi 0, %s29
      %s30 = sphi 0, %s27
      %s31 = sphi 0, %s30
      %s47 = sphi 0, %s31
      %s51 = sphi 0, %s51
      %s53 = sphi 0, %s51
      %s54 = sphi 0, %s53
      %s68 = sphi 0, %s54
      %s72 = sphi 0, %s72
      %s74 = sphi 0, %s72
      %s75 = sphi 0, %s74
      %s89 = sphi 0, %s75
      %s93 = sphi 0, %s93
      %s95 = sphi 0, %s93
      %s96 = sphi 0, %s95
      %s110 = sphi 0, %s96
      %s114 = sphi 0, %s114
      %s116 = sphi 0, %s114
      %s117 = sphi 0, %s116
      %s131 = sphi 0, %s117
      %s137 = sphi 0, %s139
      %s140 = sphi 0, %s137
      %s141 = sphi 0, %s140
      %s157 = sphi 0, %s141
    $region4: #{tpu_custom_call.1} parent=1 // loop_header_branch
      %20 = sbr.rel (%p18) target = $region8
    $region5: #{tpu_custom_call.1} parent=1 // loop_body
      %s22 = ssub.s32 %s17, 1
      %s23 = ssub.s32 %s17, 2
      %s24 = sadd.s32 %s17, 1
      %s25 = ssub.s32 %s17, %s24
      %p26 = scmp.eq.s32.totalorder %s25, 0
      %s28 = sadd.s32 %s27, 1
      %s29 = scalar_select %p26, %s27, %s28
      %p32 = pneg %p26
      %p33 = scmp.eq.s32.totalorder %s17, 1
      %p34 = por %p32, %p33
      %p35 = scmp.ne.s32.totalorder %s27, %s30
      %p36 = scmp.eq.s32.totalorder %s17, 0
      %p37 = por %p35, %p36
      %p38 = scmp.ne.s32.totalorder %s27, %s30
      %p39 = scmp.eq.s32.totalorder %s22, 1
      %p40 = por %p38, %p39
      %p41 = scmp.ne.s32.totalorder %s30, %s31
      %p42 = scmp.eq.s32.totalorder %s22, 0
      %p43 = por %p41, %p42
      %p44 = scmp.ne.s32.totalorder %s30, %s31
      %p45 = scmp.eq.s32.totalorder %s23, 1
      %p46 = por %p44, %p45
      %p48 = scmp.ne.s32.totalorder %s31, %s47
      %p49 = scmp.eq.s32.totalorder %s23, 0
      %p50 = por %p48, %p49
      %s52 = sadd.s32 %s51, 1
      %p55 = scmp.eq.s32.totalorder %s17, 1
      %p56 = scmp.ne.s32.totalorder %s51, %s53
      %p57 = scmp.eq.s32.totalorder %s17, 0
      %p58 = por %p56, %p57
      %p59 = scmp.ne.s32.totalorder %s51, %s53
      %p60 = scmp.eq.s32.totalorder %s22, 1
      %p61 = por %p59, %p60
      %p62 = scmp.ne.s32.totalorder %s53, %s54
      %p63 = scmp.eq.s32.totalorder %s22, 0
      %p64 = por %p62, %p63
      %p65 = scmp.ne.s32.totalorder %s53, %s54
      %p66 = scmp.eq.s32.totalorder %s23, 1
      %p67 = por %p65, %p66
      %p69 = scmp.ne.s32.totalorder %s54, %s68
      %p70 = scmp.eq.s32.totalorder %s23, 0
      %p71 = por %p69, %p70
      %s73 = sadd.s32 %s72, 1
      %p76 = scmp.eq.s32.totalorder %s17, 1
      %p77 = scmp.ne.s32.totalorder %s72, %s74
      %p78 = scmp.eq.s32.totalorder %s17, 0
      %p79 = por %p77, %p78
      %p80 = scmp.ne.s32.totalorder %s72, %s74
      %p81 = scmp.eq.s32.totalorder %s22, 1
      %p82 = por %p80, %p81
      %p83 = scmp.ne.s32.totalorder %s74, %s75
      %p84 = scmp.eq.s32.totalorder %s22, 0
      %p85 = por %p83, %p84
      %p86 = scmp.ne.s32.totalorder %s74, %s75
      %p87 = scmp.eq.s32.totalorder %s23, 1
      %p88 = por %p86, %p87
      %p90 = scmp.ne.s32.totalorder %s75, %s89
      %p91 = scmp.eq.s32.totalorder %s23, 0
      %p92 = por %p90, %p91
      %s94 = sadd.s32 %s93, 1
      %p97 = scmp.eq.s32.totalorder %s17, 1
      %p98 = scmp.ne.s32.totalorder %s93, %s95
      %p99 = scmp.eq.s32.totalorder %s17, 0
      %p100 = por %p98, %p99
      %p101 = scmp.ne.s32.totalorder %s93, %s95
      %p102 = scmp.eq.s32.totalorder %s22, 1
      %p103 = por %p101, %p102
      %p104 = scmp.ne.s32.totalorder %s95, %s96
      %p105 = scmp.eq.s32.totalorder %s22, 0
      %p106 = por %p104, %p105
      %p107 = scmp.ne.s32.totalorder %s95, %s96
      %p108 = scmp.eq.s32.totalorder %s23, 1
      %p109 = por %p107, %p108
      %p111 = scmp.ne.s32.totalorder %s96, %s110
      %p112 = scmp.eq.s32.totalorder %s23, 0
      %p113 = por %p111, %p112
      %s115 = sadd.s32 %s114, 1
      %p118 = scmp.eq.s32.totalorder %s17, 1
      %p119 = scmp.ne.s32.totalorder %s114, %s116
      %p120 = scmp.eq.s32.totalorder %s17, 0
      %p121 = por %p119, %p120
      %p122 = scmp.ne.s32.totalorder %s114, %s116
      %p123 = scmp.eq.s32.totalorder %s22, 1
      %p124 = por %p122, %p123
      %p125 = scmp.ne.s32.totalorder %s116, %s117
      %p126 = scmp.eq.s32.totalorder %s22, 0
      %p127 = por %p125, %p126
      %p128 = scmp.ne.s32.totalorder %s116, %s117
      %p129 = scmp.eq.s32.totalorder %s23, 1
      %p130 = por %p128, %p129
      %p132 = scmp.ne.s32.totalorder %s117, %s131
      %p133 = scmp.eq.s32.totalorder %s23, 0
      %p134 = por %p132, %p133
      %s135 = ssub.s32 %s17, %s24
      %p136 = scmp.eq.s32.totalorder %s135, 0
      %s138 = sadd.s32 %s137, 1
      %s139 = scalar_select %p136, %s137, %s138
      %p142 = pneg %p136
      %p143 = scmp.eq.s32.totalorder %s17, 1
      %p144 = por %p142, %p143
      %p145 = scmp.ne.s32.totalorder %s137, %s140
      %p146 = scmp.eq.s32.totalorder %s17, 0
      %p147 = por %p145, %p146
      %p148 = scmp.ne.s32.totalorder %s137, %s140
      %p149 = scmp.eq.s32.totalorder %s22, 1
      %p150 = por %p148, %p149
      %p151 = scmp.ne.s32.totalorder %s140, %s141
      %p152 = scmp.eq.s32.totalorder %s22, 0
      %p153 = por %p151, %p152
      %p154 = scmp.ne.s32.totalorder %s140, %s141
      %p155 = scmp.eq.s32.totalorder %s23, 1
      %p156 = por %p154, %p155
      %p158 = scmp.ne.s32.totalorder %s141, %s157
      %p159 = scmp.eq.s32.totalorder %s23, 0
      %p160 = por %p158, %p159
      %p161 = scmp.le.s32.totalorder 1, %s17
      %p162 = scmp.lt.s32.totalorder %s17, 3
      %p163 = pnand %p161, %p162
      %p164 = pneg %p163
      // Predicated region
      $region9: #{tpu_custom_call.1} parent=5 // pred_check
        _
      $region10: #{tpu_custom_call.1} parent=5 // pred_check_branch
        %166 = sbr.rel (%p163) target = $region12
      $region11: #{tpu_custom_call.1} parent=5 // pred_region
        %s167 = ssub.s32 %s17, 1
        // Predicated region
        $region13: #{tpu_custom_call.1} parent=11 // pred_check
          %p168 = pneg %p64
        $region14: #{tpu_custom_call.1} parent=11 // pred_check_branch
          %170 = sbr.rel (%p168) target = $region16
        $region15: #{tpu_custom_call.1} parent=11 // pred_region
          _
        $region16: #{tpu_custom_call.1} parent=11 // pred_fallthru
          _
        // Predicated region
        $region17: #{tpu_custom_call.1} parent=11 // pred_check
          %p171 = pneg %p85
        $region18: #{tpu_custom_call.1} parent=11 // pred_check_branch
          %173 = sbr.rel (%p171) target = $region20
        $region19: #{tpu_custom_call.1} parent=11 // pred_region
          _
        $region20: #{tpu_custom_call.1} parent=11 // pred_fallthru
          _
        // Predicated region
        $region21: #{tpu_custom_call.1} parent=11 // pred_check
          %p174 = pneg %p106
        $region22: #{tpu_custom_call.1} parent=11 // pred_check_branch
          %176 = sbr.rel (%p174) target = $region24
        $region23: #{tpu_custom_call.1} parent=11 // pred_region
          _
        $region24: #{tpu_custom_call.1} parent=11 // pred_fallthru
          _
        // Predicated region
        $region25: #{tpu_custom_call.1} parent=11 // pred_check
          %p177 = pneg %p127
        $region26: #{tpu_custom_call.1} parent=11 // pred_check_branch
          %179 = sbr.rel (%p177) target = $region28
        $region27: #{tpu_custom_call.1} parent=11 // pred_region
          _
        $region28: #{tpu_custom_call.1} parent=11 // pred_fallthru
          _
      $region12: #{tpu_custom_call.1} parent=5 // pred_fallthru
        _
      %p180 = scmp.lt.s32.totalorder %s17, 2
      // Predicated region
      $region29: #{tpu_custom_call.1} parent=5 // pred_check
        %p181 = pneg %p180
      $region30: #{tpu_custom_call.1} parent=5 // pred_check_branch
        %183 = sbr.rel (%p181) target = $region32
      $region31: #{tpu_custom_call.1} parent=5 // pred_region
        // Predicated region
        $region33: #{tpu_custom_call.1} parent=31 // pred_check
          %p184 = pneg %p37
        $region34: #{tpu_custom_call.1} parent=31 // pred_check_branch
          %186 = sbr.rel (%p184) target = $region36
        $region35: #{tpu_custom_call.1} parent=31 // pred_region
          %s187 = sand.u32 %s27, 1
          %s188 = scalar_lea.sflag [#allocation3], %s187
          %s189 = sand.u32 %s27, 1
          %s190 = smul.addr %s189, 32
          %s191 = scalar_lea.vmem [#allocation2], %s190
          %s192 = smul.u32 2, %s17
          %s194 = ssub.s32 512, 512
          %195 = vsyncadd %s188, %s194
          %s196 = smul.addr %s192, 2
          %s197 = smul.addr %s196, 128
          %s198 = scalar_lea.hbm %s0, %s197
          %s199 = sshll.u32 %s191, 4
          %s200 = int_to_ptr.vmem [resolvable:$true] %s199
          %205 = dma.hbm_to_vmem [thread:$0]  %s198, 512, %s200, %s188, 256, 256, 16
        $region36: #{tpu_custom_call.1} parent=31 // pred_fallthru
          _
      $region32: #{tpu_custom_call.1} parent=5 // pred_fallthru
        _
      %p206 = scmp.le.s32.totalorder 1, %s17
      %p207 = scmp.lt.s32.totalorder %s17, 3
      %p208 = pnand %p206, %p207
      %p209 = pneg %p208
      // Predicated region
      $region37: #{tpu_custom_call.1} parent=5 // pred_check
        _
      $region38: #{tpu_custom_call.1} parent=5 // pred_check_branch
        %211 = sbr.rel (%p208) target = $region40
      $region39: #{tpu_custom_call.1} parent=5 // pred_region
        %s212 = ssub.s32 %s17, 1
        %s213 = sand.u32 %s30, 1
        %s214 = scalar_lea.sflag [#allocation3], %s213
        %s215 = sand.u32 %s30, 1
        %s216 = smul.addr %s215, 32
        %s217 = scalar_lea.vmem [#allocation2], %s216
        // Predicated region
        $region41: #{tpu_custom_call.1} parent=39 // pred_check
          %p218 = pneg %p43
        $region42: #{tpu_custom_call.1} parent=39 // pred_check_branch
          %220 = sbr.rel (%p218) target = $region44
        $region43: #{tpu_custom_call.1} parent=39 // pred_region
          %221 = dma.done %s214, 512
        $region44: #{tpu_custom_call.1} parent=39 // pred_fallthru
          _
        %s222 = sand.u32 %s30, 1
        %s223 = scalar_lea.sflag [#allocation3], %s222
        %s224 = sand.u32 %s30, 1
        %s225 = smul.addr %s224, 32
        %s226 = scalar_lea.vmem [#allocation2], %s225
        %p227 = pneg %p43
        %p228 = pneg %p40
        %p229 = pneg %p64
        %p230 = pneg %p61
        %p231 = pneg %p85
        %p232 = pneg %p82
        %p233 = pneg %p106
        %p234 = pneg %p103
        %p235 = pneg %p127
        %p236 = pneg %p124
        %p237 = pneg %p153
        %p238 = pneg %p150
        %s239 = sand.u32 %s140, 1
        %s240 = scalar_lea.sflag [#allocation4], %s239
        %s241 = sand.u32 %s140, 1
        %s242 = smul.addr %s241, 32
        %s243 = scalar_lea.vmem [#allocation5], %s242
        %s244 = smul.u32 2, %s22
        %s245 = smul.u32 2, %s22
        %v246 = vld [vmem:[%s217] sm:$0xff]
        %v247 = vld [vmem:[%s217 + $0x8] sm:$0xff]
        %v248 = vld [vmem:[%s217 + $0x10] sm:$0xff]
        %v249 = vld [vmem:[%s217 + $0x18] sm:$0xff]
        %v250 = vadd.f32 %v246, %v247
        %251 = vadd.xlane.f32.xlu0 %v250
        %v252 = vpop.xlane.xlu0 %251
        %v253 = vadd.f32 %v248, %v249
        %254 = vadd.xlane.f32.xlu0 %v253
        %v255 = vpop.xlane.xlu0 %254
        %v256 = vmul.f32 %v246, %v246
        %v257 = vmul.f32 %v247, %v247
        %v258 = vmul.f32 %v248, %v248
        %v259 = vmul.f32 %v249, %v249
        %v260 = vadd.f32 %v256, %v257
        %261 = vadd.xlane.f32.xlu0 %v260
        %v262 = vpop.xlane.xlu0 %261
        %v263 = vadd.f32 %v258, %v259
        %264 = vadd.xlane.f32.xlu0 %v263
        %v265 = vpop.xlane.xlu0 %264
        %vm266 = vcmask 7168
        %v267 = vsel %vm266, %v252, %v262
        %v268 = vsel %vm266, %v255, %v265
        %v269 = vld [vmem:[%s1] sm:$0xff]
        %vm270 = vcmask 130048
        %v272 = vsel %vm270, %v269, 0
        %274 = vmatprep.subr.mxu0 0.0
        %275 = vmatpush1.msra.mxu0 %v267
        %276 = vmatprep.subr.mxu0 0.0
        %277 = vmatpush1.msra.mxu0 %v268
        %278 = vmatprep.subr.mxu0 0.0
        %279 = vmatpush1.msra.mxu0 0.0
        %280 = vmatprep.subr.mxu0 0.0
        %281 = vmatpush1.msra.mxu0 0.0
        %282 = vmatprep.subr.mxu0 0.0
        %283 = vmatpush1.msra.mxu0 0.0
        %284 = vmatprep.subr.mxu0 0.0
        %285 = vmatpush1.msra.mxu0 0.0
        %286 = vmatprep.subr.mxu0 0.0
        %287 = vmatpush1.msra.mxu0 0.0
        %288 = vmatprep.subr.mxu0 0.0
        %289 = vmatpush1.msra.mxu0 0.0
        %290 = vmatprep.subr.mxu0 0.0
        %291 = vmatpush1.msra.mxu0 0.0
        %292 = vmatprep.subr.mxu0 0.0
        %293 = vmatpush1.msra.mxu0 0.0
        %294 = vmatprep.subr.mxu0 0.0
        %295 = vmatpush1.msra.mxu0 0.0
        %296 = vmatprep.subr.mxu0 0.0
        %297 = vmatpush1.msra.mxu0 0.0
        %298 = vmatprep.subr.mxu0 0.0
        %299 = vmatpush1.msra.mxu0 0.0
        %300 = vmatprep.subr.mxu0 0.0
        %301 = vmatpush1.msra.mxu0 0.0
        %302 = vmatprep.subr.mxu0 0.0
        %303 = vmatpush1.msra.mxu0 0.0
        %304 = vmatprep.subr.mxu0 0.0
        %305 = vmatpush1.msra.mxu0 0.0
        %306 = vmatprep.subr.mxu0 0.0
        %307 = vmatpush1.msra.mxu0 0.0
        %308 = vmatprep.subr.mxu0 0.0
        %309 = vmatpush1.msra.mxu0 0.0
        %310 = vmatprep.subr.mxu0 0.0
        %311 = vmatpush1.msra.mxu0 0.0
        %312 = vmatprep.subr.mxu0 0.0
        %313 = vmatpush1.msra.mxu0 0.0
        %314 = vmatprep.subr.mxu0 0.0
        %315 = vmatpush1.msra.mxu0 0.0
        %316 = vmatprep.subr.mxu0 0.0
        %317 = vmatpush1.msra.mxu0 0.0
        %318 = vmatprep.subr.mxu0 0.0
        %319 = vmatpush1.msra.mxu0 0.0
        %320 = vmatprep.subr.mxu0 0.0
        %321 = vmatpush1.msra.mxu0 0.0
        %322 = vmatprep.subr.mxu0 0.0
        %323 = vmatpush1.msra.mxu0 0.0
        %324 = vmatprep.subr.mxu0 0.0
        %325 = vmatpush1.msra.mxu0 0.0
        %326 = vmatprep.subr.mxu0 0.0
        %327 = vmatpush1.msra.mxu0 0.0
        %328 = vmatprep.subr.mxu0 0.0
        %329 = vmatpush1.msra.mxu0 0.0
        %330 = vmatprep.subr.mxu0 0.0
        %331 = vmatpush1.msra.mxu0 0.0
        %332 = vmatprep.subr.mxu0 0.0
        %333 = vmatpush1.msra.mxu0 0.0
        %334 = vmatprep.subr.mxu0 0.0
        %335 = vmatpush1.msra.mxu0 0.0
        %336 = vmatprep.subr.mxu0 0.0
        %337 = vmatpush1.msra.mxu0 0.0
        %338 = vmatprep.mubr.f32.mxu0 0.0
        %339 = vmatmul.mubr.f32.gmra.mrb[0].mxu0 %v272
        %v340 = vpop.f32.mrb[0].mxu0
        %v341 = vadd.f32 0.0, %v340
        %v342 = vpop.f32.mrb[0].mxu0
        %343 = vdwg.mxu0
        %v344 = vmul.f32 %v341, 0.001953125
        %v345 = vmul.f32 %v344, %v344
        %347 = vrot.lane.b32.xlu0 %v345, 1
        %v348 = vpop.permute.xlu0 %347
        %v350 = vsub.f32 %v344, %v348
        %v351 = vmax.f32 %v350, 0.0
        %v352 = vld [vmem:[%s2] sm:$0xff]
        %v353 = vld [vmem:[%s2 + $0x8] sm:$0xff]
        %v354 = vsel %vm266, %v344, %v351
        %vm355 = vcmask 64512
        %v357 = vsel %vm355, %v352, 0
        %v360 = vsel %vm355, %v353, 0
        %362 = vmatprep.subr.mxu0 0.0
        %363 = vmatpush1.msra.mxu0 %v354
        %364 = vmatprep.subr.mxu0 0.0
        %365 = vmatpush1.msra.mxu0 0.0
        %366 = vmatprep.subr.mxu0 0.0
        %367 = vmatpush1.msra.mxu0 0.0
        %368 = vmatprep.subr.mxu0 0.0
        %369 = vmatpush1.msra.mxu0 0.0
        %370 = vmatprep.subr.mxu0 0.0
        %371 = vmatpush1.msra.mxu0 0.0
        %372 = vmatprep.subr.mxu0 0.0
        %373 = vmatpush1.msra.mxu0 0.0
        %374 = vmatprep.subr.mxu0 0.0
        %375 = vmatpush1.msra.mxu0 0.0
        %376 = vmatprep.subr.mxu0 0.0
        %377 = vmatpush1.msra.mxu0 0.0
        %378 = vmatprep.subr.mxu0 0.0
        %379 = vmatpush1.msra.mxu0 0.0
        %380 = vmatprep.subr.mxu0 0.0
        %381 = vmatpush1.msra.mxu0 0.0
        %382 = vmatprep.subr.mxu0 0.0
        %383 = vmatpush1.msra.mxu0 0.0
        %384 = vmatprep.subr.mxu0 0.0
        %385 = vmatpush1.msra.mxu0 0.0
        %386 = vmatprep.subr.mxu0 0.0
        %387 = vmatpush1.msra.mxu0 0.0
        %388 = vmatprep.subr.mxu0 0.0
        %389 = vmatpush1.msra.mxu0 0.0
        %390 = vmatprep.subr.mxu0 0.0
        %391 = vmatpush1.msra.mxu0 0.0
        %392 = vmatprep.subr.mxu0 0.0
        %393 = vmatpush1.msra.mxu0 0.0
        %394 = vmatprep.subr.mxu0 0.0
        %395 = vmatpush1.msra.mxu0 0.0
        %396 = vmatprep.subr.mxu0 0.0
        %397 = vmatpush1.msra.mxu0 0.0
        %398 = vmatprep.subr.mxu0 0.0
        %399 = vmatpush1.msra.mxu0 0.0
        %400 = vmatprep.subr.mxu0 0.0
        %401 = vmatpush1.msra.mxu0 0.0
        %402 = vmatprep.subr.mxu0 0.0
        %403 = vmatpush1.msra.mxu0 0.0
        %404 = vmatprep.subr.mxu0 0.0
        %405 = vmatpush1.msra.mxu0 0.0
        %406 = vmatprep.subr.mxu0 0.0
        %407 = vmatpush1.msra.mxu0 0.0
        %408 = vmatprep.subr.mxu0 0.0
        %409 = vmatpush1.msra.mxu0 0.0
        %410 = vmatprep.subr.mxu0 0.0
        %411 = vmatpush1.msra.mxu0 0.0
        %412 = vmatprep.subr.mxu0 0.0
        %413 = vmatpush1.msra.mxu0 0.0
        %414 = vmatprep.subr.mxu0 0.0
        %415 = vmatpush1.msra.mxu0 0.0
        %416 = vmatprep.subr.mxu0 0.0
        %417 = vmatpush1.msra.mxu0 0.0
        %418 = vmatprep.subr.mxu0 0.0
        %419 = vmatpush1.msra.mxu0 0.0
        %420 = vmatprep.subr.mxu0 0.0
        %421 = vmatpush1.msra.mxu0 0.0
        %422 = vmatprep.subr.mxu0 0.0
        %423 = vmatpush1.msra.mxu0 0.0
        %424 = vmatprep.subr.mxu0 0.0
        %425 = vmatpush1.msra.mxu0 0.0
        %426 = vmatprep.mubr.f32.mxu0 0.0
        %427 = vmatmul.mubr.f32.gmra.mrb[0].mxu0 %v357
        %v428 = vpop.f32.mrb[0].mxu0
        %v429 = vadd.f32 0.0, %v428
        %v430 = vpop.f32.mrb[0].mxu0
        %431 = vmatprep.mubr.f32.mxu0 0.0
        %432 = vmatmul.mubr.f32.gmra.mrb[0].mxu0 %v360
        %v433 = vpop.f32.mrb[0].mxu0
        %v434 = vadd.f32 0.0, %v433
        %v435 = vpop.f32.mrb[0].mxu0
        %436 = vdwg.mxu0
        %v437 = vld [vmem:[%s3] sm:$0xff]
        %v438 = vld [vmem:[%s3 + $0x8] sm:$0xff]
        %v439 = vadd.f32 %v429, 1e-05
        %v440 = vadd.f32 %v434, 1e-05
        %v441 = vrsqrt.pop %v439
        %v442 = vrsqrt.pop %v440
        %445 = vrot.lane.b32.xlu0 %v441, 127
        %v446 = vpop.permute.xlu0 %445
        %447 = vrot.lane.b32.xlu0 %v442, 127
        %v448 = vpop.permute.xlu0 %447
        %v451 = vmul.f32 %v437, %v446
        %v452 = vmul.f32 %v438, %v448
        %v453 = vld [vmem:[%s4] sm:$0xff]
        %v454 = vld [vmem:[%s4 + $0x8] sm:$0xff]
        %v455 = vmul.f32 %v429, %v451
        %v456 = vmul.f32 %v434, %v452
        %v457 = vsub.f32 %v453, %v455
        %v458 = vsub.f32 %v454, %v456
        %460 = vset.pattern.permute.xlu0 0
        %461 = vperm.xlu0 %460, %v451
        %v462 = vpop.permute.xlu0 %461
        %465 = vset.pattern.permute.xlu0 0
        %466 = vperm.xlu0 %465, %v452
        %v467 = vpop.permute.xlu0 %466
        %v469 = vmul.f32 %v246, %v462
        %v470 = vmul.f32 %v247, %v462
        %v471 = vmul.f32 %v248, %v467
        %v472 = vmul.f32 %v249, %v467
        %474 = vset.pattern.permute.xlu0 0
        %475 = vperm.xlu0 %474, %v457
        %v476 = vpop.permute.xlu0 %475
        %479 = vset.pattern.permute.xlu0 0
        %480 = vperm.xlu0 %479, %v458
        %v481 = vpop.permute.xlu0 %480
        %v483 = vadd.f32 %v469, %v476
        %v484 = vadd.f32 %v470, %v476
        %v485 = vadd.f32 %v471, %v481
        %v486 = vadd.f32 %v472, %v481
        %v487 = vmul.f32 %v483, 0.5
        %v488 = vmul.f32 %v484, 0.5
        %v489 = vmul.f32 %v485, 0.5
        %v490 = vmul.f32 %v486, 0.5
        %v491 = vmul.f32 %v483, 0.70710677
        %v492 = vmul.f32 %v484, 0.70710677
        %v493 = vmul.f32 %v485, 0.70710677
        %v494 = vmul.f32 %v486, 0.70710677
        %v495 = verf.f32.pop %v491
        %v496 = verf.f32.pop %v492
        %v497 = verf.f32.pop %v493
        %v498 = verf.f32.pop %v494
        %v499 = vadd.f32 %v495, 1.0
        %v500 = vadd.f32 %v496, 1.0
        %v501 = vadd.f32 %v497, 1.0
        %v502 = vadd.f32 %v498, 1.0
        %v503 = vmul.f32 %v487, %v499
        %v504 = vmul.f32 %v488, %v500
        %v505 = vmul.f32 %v489, %v501
        %v506 = vmul.f32 %v490, %v502
        %507 = vst [vmem:[%s243] sm:$0xff] %v503
        %508 = vst [vmem:[%s243 + $0x8] sm:$0xff] %v504
        %509 = vst [vmem:[%s243 + $0x10] sm:$0xff] %v505
        %510 = vst [vmem:[%s243 + $0x18] sm:$0xff] %v506
        %s511 = sand.u32 %s140, 1
        %s512 = scalar_lea.sflag [#allocation4], %s511
        %s513 = sand.u32 %s140, 1
        %s514 = smul.addr %s513, 32
        %s515 = scalar_lea.vmem [#allocation5], %s514
        // Predicated region
        $region45: #{tpu_custom_call.1} parent=39 // pred_check
          %p516 = pneg %p150
        $region46: #{tpu_custom_call.1} parent=39 // pred_check_branch
          %518 = sbr.rel (%p516) target = $region48
        $region47: #{tpu_custom_call.1} parent=39 // pred_region
          %s519 = smul.u32 2, %s22
          %s521 = ssub.s32 512, 512
          %522 = vsyncadd %s512, %s521
          %s523 = smul.addr %s519, 2
          %s524 = smul.addr %s523, 128
          %s525 = scalar_lea.hbm %s5, %s524
          %s526 = sshll.u32 %s515, 4
          %s527 = int_to_ptr.vmem [resolvable:$true] %s526
          %532 = dma.vmem_to_hbm [thread:$0]  %s527, 512, %s525, %s512, 256, 256, 16
        $region48: #{tpu_custom_call.1} parent=39 // pred_fallthru
          _
      $region40: #{tpu_custom_call.1} parent=5 // pred_fallthru
        _
      %p533 = scmp.le.s32.totalorder 2, %s17
      // Predicated region
      $region49: #{tpu_custom_call.1} parent=5 // pred_check
        %p534 = pneg %p533
      $region50: #{tpu_custom_call.1} parent=5 // pred_check_branch
        %536 = sbr.rel (%p534) target = $region52
      $region51: #{tpu_custom_call.1} parent=5 // pred_region
        %s537 = ssub.s32 %s17, 2
        // Predicated region
        $region53: #{tpu_custom_call.1} parent=51 // pred_check
          %p538 = pneg %p156
        $region54: #{tpu_custom_call.1} parent=51 // pred_check_branch
          %540 = sbr.rel (%p538) target = $region56
        $region55: #{tpu_custom_call.1} parent=51 // pred_region
          %s541 = sand.u32 %s141, 1
          %s542 = scalar_lea.sflag [#allocation4], %s541
          %s543 = sand.u32 %s141, 1
          %s544 = smul.addr %s543, 32
          %s545 = scalar_lea.vmem [#allocation5], %s544
          %546 = dma.done %s542, 512
        $region56: #{tpu_custom_call.1} parent=51 // pred_fallthru
          _
      $region52: #{tpu_custom_call.1} parent=5 // pred_fallthru
        _
    $region6: #{tpu_custom_call.1} parent=1 // loop_footer
      %s21 = sadd.s32 1, %s17
    $region7: #{tpu_custom_call.1} parent=1 // loop_footer_branch
      %16 = sbr.rel target = $region3
    $region8: #{tpu_custom_call.1} parent=1 // loop_exit
      _
    %547 = vsyncpa [#allocation3], 1
    %s548 = scalar_lea.sflag [#allocation3], 1
    %549 = vsyncpa %s548, 1
    %550 = vsyncpa [#allocation4], 1
    %s551 = scalar_lea.sflag [#allocation4], 1
    %552 = vsyncpa %s551, 1

</llo_original>
